<compile_context>
chip_gen: v5e
topology: v5e:2x2
jax: 0.10.0
libtpu: 0.0.40
codegen_flags: <defaults>
</compile_context>

<pallas_src>
import functools

import jax
import jax.numpy as jnp
from jax import lax
from jax.experimental import pallas as pl
from jax.experimental.pallas import tpu as pltpu

EPS = 1e-5
K = 3  # fixed 3x3 funnel kernel, stride=1, padding=1


def _frelu_kernel(w_ref, x_ref, o_ref, *, H, W):
    # w_ref: VMEM (TC, 9)     depthwise 3x3 weights (row-major taps), this channel block
    # x_ref: VMEM (1, TC, HW) flattened (H*W) planes of TC channels for one sample
    # o_ref: VMEM (1, TC, HW)
    HW = H * W
    x = x_ref[0].astype(jnp.float32)          # (TC, HW)
    w = w_ref[...].astype(jnp.float32)        # (TC, 9)

    # Flat lane index and column index for the 3x3 tap boundary masks.
    lane = lax.broadcasted_iota(jnp.int32, (1, HW), 1)
    if W & (W - 1) == 0:
        col = jnp.bitwise_and(lane, W - 1)
    else:
        col = lane % W
    not_top = lane >= W                 # row >= 1      (needed for di = -1)
    not_bot = lane < (H - 1) * W        # row <= H - 2  (needed for di = +1)
    not_left = col >= 1                 # col >= 1      (needed for dj = -1)
    not_right = col <= W - 2            # col <= W - 2  (needed for dj = +1)

    # Column-shifted planes (XLU lane rolls), masked once each for column validity.
    #   xL[p] = x[p-1] (zero at col 0),  xR[p] = x[p+1] (zero at col W-1)
    xL = jnp.where(not_left, pltpu.roll(x, shift=1, axis=1), 0.0)
    xR = jnp.where(not_right, pltpu.roll(x, shift=HW - 1, axis=1), 0.0)

    def row_combine(di):
        # Weighted sum over the three column taps of kernel row (di + 1).
        base = (di + 1) * K
        return (w[:, base:base + 1] * xL
                + w[:, base + 1:base + 2] * x
                + w[:, base + 2:base + 3] * xR)

    # Depthwise 3x3 cross-correlation (padding=1): center row contributes
    # directly; the +-1 rows are a single +-W lane roll of their weighted
    # column combination, masked at the plane top/bottom.
    acc = row_combine(0)
    acc = acc + jnp.where(not_top, pltpu.roll(row_combine(-1), shift=W, axis=1), 0.0)
    acc = acc + jnp.where(not_bot, pltpu.roll(row_combine(1), shift=HW - W, axis=1), 0.0)
    # NOTE: the conv bias is intentionally omitted — InstanceNorm2d(affine=False)
    # subtracts the per-channel mean, so a per-channel constant cancels exactly.

    # InstanceNorm2d (affine=False): per-channel mean / biased variance over H*W.
    inv_hw = 1.0 / HW
    mean = jnp.sum(acc, axis=-1, keepdims=True) * inv_hw            # (TC, 1)
    centered = acc - mean
    var = jnp.sum(centered * centered, axis=-1, keepdims=True) * inv_hw
    tx = centered * lax.rsqrt(var + EPS)

    # FReLU: elementwise max of identity branch and funnel branch.
    o_ref[0] = jnp.maximum(x, tx).astype(o_ref.dtype)


def _choose_block_channels(C, HW, budget_bytes=12 << 20):
    # ~10 f32 planes of TC*HW are live per step (double-buffered in/out +
    # intermediates); keep that under a conservative scoped-VMEM budget so the
    # same choice is safe on v5e/v6e/v7x.
    per_ch = HW * 4 * 10
    max_tc = max(1, budget_bytes // per_ch)
    if C <= max_tc:
        return C            # block dim == full channel dim is always legal
    best = 0
    tc = 8                  # otherwise the sublane block dim must be a multiple of 8
    while tc <= min(C, max_tc):
        if C % tc == 0:
            best = tc
        tc += 8
    return best if best else C


def frelu_pallas(x, weight, bias, *, block_channels=None):
    """x: (N, C, H, W); weight: (C, 3, 3); bias: (C,).

    `bias` is accepted for API parity with nn.Conv2d but is not fed to the
    kernel: InstanceNorm2d(affine=False) makes a per-channel conv bias cancel.
    """
    del bias
    N, C, H, W = x.shape
    HW = H * W
    TC = block_channels if block_channels is not None else _choose_block_channels(C, HW)
    assert C % TC == 0

    x_flat = x.reshape(N, C, HW)                       # lane-dense last dim (free reshape)
    w2 = weight.reshape(C, K * K).astype(jnp.float32)

    out_flat = pl.pallas_call(
        functools.partial(_frelu_kernel, H=H, W=W),
        out_shape=jax.ShapeDtypeStruct((N, C, HW), x.dtype),
        grid=(N, C // TC),
        in_specs=[
            pl.BlockSpec((TC, K * K), lambda n, cb: (cb, 0)),    # weights per block
            pl.BlockSpec((1, TC, HW), lambda n, cb: (n, cb, 0)),
        ],
        out_specs=pl.BlockSpec((1, TC, HW), lambda n, cb: (n, cb, 0)),
        compiler_params=pltpu.CompilerParams(
            dimension_semantics=("parallel", "parallel")),
    )(w2, x_flat)
    return out_flat.reshape(N, C, H, W)


def frelu_reference(x, weight, bias):
    """Pure-JAX reference matching PyTorch FReLU forward."""
    N, C, H, W = x.shape
    w = weight.reshape(C, 1, K, K)  # OIHW with feature_group_count=C (depthwise)
    conv = lax.conv_general_dilated(
        x, w, window_strides=(1, 1), padding=((1, 1), (1, 1)),
        dimension_numbers=("NCHW", "OIHW", "NCHW"),
        feature_group_count=C,
    ) + bias.reshape(1, C, 1, 1)
    mean = jnp.mean(conv, axis=(2, 3), keepdims=True)
    var = jnp.mean((conv - mean) ** 2, axis=(2, 3), keepdims=True)
    tx = (conv - mean) * lax.rsqrt(var + EPS)
    return jnp.maximum(x, tx)


if __name__ == "__main__":
    key = jax.random.PRNGKey(0)
    kx, kw, kb = jax.random.split(key, 3)

    N, C, H, W = 2, 4, 16, 16
    x = jax.random.normal(kx, (N, C, H, W), dtype=jnp.float32)
    # nn.Conv2d(C, C, 3, groups=C) -> weight (C, 1, 3, 3) collapsed to (C, 3, 3), bias (C,)
    weight = jax.random.normal(kw, (C, K, K), dtype=jnp.float32) * 0.2
    bias = jax.random.normal(kb, (C,), dtype=jnp.float32) * 0.1

    out = frelu_pallas(x, weight, bias)
    out = jax.block_until_ready(out)

    ref = frelu_reference(x, weight, bias)
    assert out.shape == (N, C, H, W)
    err = jnp.max(jnp.abs(out - ref))
    assert jnp.allclose(out, ref, rtol=1e-4, atol=1e-4), f"max abs err = {err}"

    print("KERNEL_OK")
</pallas_src>

<mosaic_0001>
module attributes {stable_mosaic.version = 11 : i64} {
  func.func @_frelu_kernel(%arg0: i32, %arg1: i32, %arg2: memref<4x9xf32, #tpu.memory_space<vmem>>, %arg3: memref<1x4x256xf32, #tpu.memory_space<vmem>>, %arg4: memref<1x4x256xf32, #tpu.memory_space<vmem>>) attributes {dimension_semantics = [#tpu.dimension_semantics<parallel>, #tpu.dimension_semantics<parallel>], iteration_bounds = array<i64: 2, 1>, scalar_prefetch = 0 : i64, scratch_operands = 0 : i64, tpu.core_type = #tpu.core_type<tc>, window_params = [{transform_indices = @transform_0, window_bounds = array<i64: 4, 9>}, {transform_indices = @transform_1, window_bounds = array<i64: 1, 4, 256>}, {transform_indices = @transform_2, window_bounds = array<i64: 1, 4, 256>}]} {
    %c0 = arith.constant 0 : index
    %c0_0 = arith.constant 0 : index
    %c0_1 = arith.constant 0 : index
    %0 = vector.load %arg3[%c0, %c0_0, %c0_1] : memref<1x4x256xf32, #tpu.memory_space<vmem>>, vector<1x4x256xf32>
    %1 = vector.shape_cast %0 : vector<1x4x256xf32> to vector<4x256xf32>
    %c0_2 = arith.constant 0 : index
    %c0_3 = arith.constant 0 : index
    %2 = vector.load %arg2[%c0_2, %c0_3] : memref<4x9xf32, #tpu.memory_space<vmem>>, vector<4x9xf32>
    %3 = tpu.iota {dimensions = array<i32: 1>} : vector<1x256xi32>
    %c15_i32 = arith.constant 15 : i32
    %4 = vector.broadcast %c15_i32 : i32 to vector<1x256xi32>
    %5 = arith.andi %3, %4 : vector<1x256xi32>
    %c16_i32 = arith.constant 16 : i32
    %6 = vector.broadcast %c16_i32 : i32 to vector<1x256xi32>
    %7 = arith.cmpi sge, %3, %6 : vector<1x256xi32>
    %c240_i32 = arith.constant 240 : i32
    %8 = vector.broadcast %c240_i32 : i32 to vector<1x256xi32>
    %9 = arith.cmpi slt, %3, %8 : vector<1x256xi32>
    %c1_i32 = arith.constant 1 : i32
    %10 = vector.broadcast %c1_i32 : i32 to vector<1x256xi32>
    %11 = arith.cmpi sge, %5, %10 : vector<1x256xi32>
    %c14_i32 = arith.constant 14 : i32
    %12 = vector.broadcast %c14_i32 : i32 to vector<1x256xi32>
    %13 = arith.cmpi sle, %5, %12 : vector<1x256xi32>
    %c1_i32_4 = arith.constant 1 : i32
    %14 = tpu.dynamic_rotate %1 by %c1_i32_4 dim 1 : vector<4x256xf32>, i32 -> vector<4x256xf32>
    %cst = arith.constant 0.000000e+00 : f32
    %15 = vector.shape_cast %11 : vector<1x256xi1> to vector<1x256xi1>
    %16 = vector.broadcast %15 : vector<1x256xi1> to vector<4x256xi1>
    %17 = vector.broadcast %cst : f32 to vector<4x256xf32>
    %18 = arith.select %16, %14, %17 : vector<4x256xi1>, vector<4x256xf32>
    %c255_i32 = arith.constant 255 : i32
    %19 = tpu.dynamic_rotate %1 by %c255_i32 dim 1 : vector<4x256xf32>, i32 -> vector<4x256xf32>
    %cst_5 = arith.constant 0.000000e+00 : f32
    %20 = vector.shape_cast %13 : vector<1x256xi1> to vector<1x256xi1>
    %21 = vector.broadcast %20 : vector<1x256xi1> to vector<4x256xi1>
    %22 = vector.broadcast %cst_5 : f32 to vector<4x256xf32>
    %23 = arith.select %21, %19, %22 : vector<4x256xi1>, vector<4x256xf32>
    %24 = vector.extract_strided_slice %2 {offsets = [0, 3], sizes = [4, 1], strides = [1, 1]} : vector<4x9xf32> to vector<4x1xf32>
    %25 = vector.broadcast %24 : vector<4x1xf32> to vector<4x256xf32>
    %26 = arith.mulf %25, %18 : vector<4x256xf32>
    %27 = vector.extract_strided_slice %2 {offsets = [0, 4], sizes = [4, 1], strides = [1, 1]} : vector<4x9xf32> to vector<4x1xf32>
    %28 = vector.broadcast %27 : vector<4x1xf32> to vector<4x256xf32>
    %29 = arith.mulf %28, %1 : vector<4x256xf32>
    %30 = arith.addf %26, %29 : vector<4x256xf32>
    %31 = vector.extract_strided_slice %2 {offsets = [0, 5], sizes = [4, 1], strides = [1, 1]} : vector<4x9xf32> to vector<4x1xf32>
    %32 = vector.broadcast %31 : vector<4x1xf32> to vector<4x256xf32>
    %33 = arith.mulf %32, %23 : vector<4x256xf32>
    %34 = arith.addf %30, %33 : vector<4x256xf32>
    %35 = vector.extract_strided_slice %2 {offsets = [0, 0], sizes = [4, 1], strides = [1, 1]} : vector<4x9xf32> to vector<4x1xf32>
    %36 = vector.broadcast %35 : vector<4x1xf32> to vector<4x256xf32>
    %37 = arith.mulf %36, %18 : vector<4x256xf32>
    %38 = vector.extract_strided_slice %2 {offsets = [0, 1], sizes = [4, 1], strides = [1, 1]} : vector<4x9xf32> to vector<4x1xf32>
    %39 = vector.broadcast %38 : vector<4x1xf32> to vector<4x256xf32>
    %40 = arith.mulf %39, %1 : vector<4x256xf32>
    %41 = arith.addf %37, %40 : vector<4x256xf32>
    %42 = vector.extract_strided_slice %2 {offsets = [0, 2], sizes = [4, 1], strides = [1, 1]} : vector<4x9xf32> to vector<4x1xf32>
    %43 = vector.broadcast %42 : vector<4x1xf32> to vector<4x256xf32>
    %44 = arith.mulf %43, %23 : vector<4x256xf32>
    %45 = arith.addf %41, %44 : vector<4x256xf32>
    %c16_i32_6 = arith.constant 16 : i32
    %46 = tpu.dynamic_rotate %45 by %c16_i32_6 dim 1 : vector<4x256xf32>, i32 -> vector<4x256xf32>
    %cst_7 = arith.constant 0.000000e+00 : f32
    %47 = vector.shape_cast %7 : vector<1x256xi1> to vector<1x256xi1>
    %48 = vector.broadcast %47 : vector<1x256xi1> to vector<4x256xi1>
    %49 = vector.broadcast %cst_7 : f32 to vector<4x256xf32>
    %50 = arith.select %48, %46, %49 : vector<4x256xi1>, vector<4x256xf32>
    %51 = arith.addf %34, %50 : vector<4x256xf32>
    %52 = vector.extract_strided_slice %2 {offsets = [0, 6], sizes = [4, 1], strides = [1, 1]} : vector<4x9xf32> to vector<4x1xf32>
    %53 = vector.broadcast %52 : vector<4x1xf32> to vector<4x256xf32>
    %54 = arith.mulf %53, %18 : vector<4x256xf32>
    %55 = vector.extract_strided_slice %2 {offsets = [0, 7], sizes = [4, 1], strides = [1, 1]} : vector<4x9xf32> to vector<4x1xf32>
    %56 = vector.broadcast %55 : vector<4x1xf32> to vector<4x256xf32>
    %57 = arith.mulf %56, %1 : vector<4x256xf32>
    %58 = arith.addf %54, %57 : vector<4x256xf32>
    %59 = vector.extract_strided_slice %2 {offsets = [0, 8], sizes = [4, 1], strides = [1, 1]} : vector<4x9xf32> to vector<4x1xf32>
    %60 = vector.broadcast %59 : vector<4x1xf32> to vector<4x256xf32>
    %61 = arith.mulf %60, %23 : vector<4x256xf32>
    %62 = arith.addf %58, %61 : vector<4x256xf32>
    %c240_i32_8 = arith.constant 240 : i32
    %63 = tpu.dynamic_rotate %62 by %c240_i32_8 dim 1 : vector<4x256xf32>, i32 -> vector<4x256xf32>
    %cst_9 = arith.constant 0.000000e+00 : f32
    %64 = vector.shape_cast %9 : vector<1x256xi1> to vector<1x256xi1>
    %65 = vector.broadcast %64 : vector<1x256xi1> to vector<4x256xi1>
    %66 = vector.broadcast %cst_9 : f32 to vector<4x256xf32>
    %67 = arith.select %65, %63, %66 : vector<4x256xi1>, vector<4x256xf32>
    %68 = arith.addf %51, %67 : vector<4x256xf32>
    %cst_10 = arith.constant dense<0.000000e+00> : vector<4xf32>
    %69 = vector.multi_reduction <add>, %68, %cst_10 [1] : vector<4x256xf32> to vector<4xf32>
    %70 = vector.shape_cast %69 : vector<4xf32> to vector<4x1xf32>
    %cst_11 = arith.constant 3.906250e-03 : f32
    %71 = vector.broadcast %cst_11 : f32 to vector<4x1xf32>
    %72 = arith.mulf %70, %71 : vector<4x1xf32>
    %73 = vector.broadcast %72 : vector<4x1xf32> to vector<4x256xf32>
    %74 = arith.subf %68, %73 : vector<4x256xf32>
    %75 = arith.mulf %74, %74 : vector<4x256xf32>
    %cst_12 = arith.constant dense<0.000000e+00> : vector<4xf32>
    %76 = vector.multi_reduction <add>, %75, %cst_12 [1] : vector<4x256xf32> to vector<4xf32>
    %77 = vector.shape_cast %76 : vector<4xf32> to vector<4x1xf32>
    %cst_13 = arith.constant 3.906250e-03 : f32
    %78 = vector.broadcast %cst_13 : f32 to vector<4x1xf32>
    %79 = arith.mulf %77, %78 : vector<4x1xf32>
    %cst_14 = arith.constant 9.99999974E-6 : f32
    %80 = vector.broadcast %cst_14 : f32 to vector<4x1xf32>
    %81 = arith.addf %79, %80 : vector<4x1xf32>
    %82 = math.rsqrt %81 : vector<4x1xf32>
    %83 = vector.broadcast %82 : vector<4x1xf32> to vector<4x256xf32>
    %84 = arith.mulf %74, %83 : vector<4x256xf32>
    %85 = arith.maximumf %1, %84 : vector<4x256xf32>
    %c0_15 = arith.constant 0 : index
    %c0_16 = arith.constant 0 : index
    %c0_17 = arith.constant 0 : index
    %86 = vector.load %arg4[%c0_15, %c0_16, %c0_17] : memref<1x4x256xf32, #tpu.memory_space<vmem>>, vector<1x4x256xf32>
    %87 = vector.shape_cast %86 : vector<1x4x256xf32> to vector<4x256xf32>
    %88 = vector.shape_cast %85 : vector<4x256xf32> to vector<1x4x256xf32>
    tpu.vector_store %arg4[%c0_15, %c0_16, %c0_17], %88 {strides = array<i32>} : memref<1x4x256xf32, #tpu.memory_space<vmem>>, vector<1x4x256xf32>,
    return
  }
  func.func @transform_0(%arg0: i32, %arg1: i32) -> (i32, i32) {
    %c0_i32 = arith.constant 0 : i32
    %c0_i32_0 = arith.constant 0 : i32
    return %arg1, %c0_i32 : i32, i32
  }
  func.func @transform_1(%arg0: i32, %arg1: i32) -> (i32, i32, i32) {
    %c0_i32 = arith.constant 0 : i32
    %c0_i32_0 = arith.constant 0 : i32
    return %arg0, %arg1, %c0_i32 : i32, i32, i32
  }
  func.func @transform_2(%arg0: i32, %arg1: i32) -> (i32, i32, i32) {
    %c0_i32 = arith.constant 0 : i32
    %c0_i32_0 = arith.constant 0 : i32
    return %arg0, %arg1, %c0_i32 : i32, i32, i32
  }
}

</mosaic_0001>

<llo_original>
// kernel: tpu_custom_call.1
$region0: #{tpu_custom_call.1}
  #allocation0 [shape = 'u32[]', space=smem, size = 0x4, offset = 0x4, fixed_abs, tag = 'smem constant byte address 0x4 - core index']
  #allocation1 [shape = 'u32[72,128]{1,0:T(1,128)}', space=vmem, size = 0x9000, scoped, tag = 'internal scratch']
  %s0 = inlined_call_operand.hbm [shape: f32[4,9], index: 0, kind: input, shape index: {}]
  %s1 = inlined_call_operand.hbm [shape: f32[2,4,256], index: 1, kind: input, shape index: {}]
  %s2 = inlined_call_operand.hbm [shape: f32[2,4,256], index: 2, kind: output, shape index: {}]
  %s3 = sld [smem:[#allocation0]]
  $region49: #{tpu_custom_call.1} parent=0
    _
  %s5 = ssub.s32 1, %s3
  %s6 = scalar_select 0, %s5, %s3
  $region1: #{tpu_custom_call.1} parent=0
    #allocation2 [shape = 'u8[2048]{0}', space=vmem, size = 0x800, scoped, tag = 'input window, operand 0, single buffered']
    #allocation3 [shape = 's32[2]{0}', space=sflag, size = 0x8, scoped, tag = 'scoped memory for tpu_custom_call.1']
    #allocation4 [shape = 's32[2]{0}', space=sflag, size = 0x8, scoped, tag = 'scoped memory for tpu_custom_call.1']
    #allocation5 [shape = 'u8[8192]{0}', space=vmem, size = 0x2000, scoped, tag = 'input window, operand 1']
    #allocation6 [shape = 's32[2]{0}', space=sflag, size = 0x8, scoped, tag = 'scoped memory for tpu_custom_call.1']
    #allocation7 [shape = 'u8[8192]{0}', space=vmem, size = 0x2000, scoped, tag = 'output window, operand 0']
    %7 = vsyncpa [#allocation3], 0
    %8 = vsyncpa [#allocation6], 0
    %s9 = scalar_lea.sflag [#allocation6], 1
    %10 = vsyncpa %s9, 0
    %11 = vsyncpa [#allocation4], 0
    %s12 = scalar_lea.sflag [#allocation4], 1
    %13 = vsyncpa %s12, 0
    loop: start=0, step=1, limit=4
    $region2: #{tpu_custom_call.1} parent=1 // loop_pre_header
      _
    $region3: #{tpu_custom_call.1} parent=1 // loop_header
      %s15 = sphi 0, %s19
      %p16 = scmp.ge.s32.totalorder %s15, 4
      %s22 = sphi 0, %s34
      %s23 = sphi 0, %s30
      %s24 = sphi 0, %s22
      %s25 = sphi 0, %s23
      %s26 = sphi 0, %s24
      %s27 = sphi 0, %s25
      %s37 = sphi 0, %s39
      %s40 = sphi 0, %s37
      %s41 = sphi 0, %s40
      %s57 = sphi 0, %s41
      %s65 = sphi 0, %s67
      %s68 = sphi 0, %s65
      %s69 = sphi 0, %s68
      %s85 = sphi 0, %s69
      %s93 = sphi 0, %s95
      %s96 = sphi 0, %s93
      %s97 = sphi 0, %s96
      %s113 = sphi 0, %s97
    $region4: #{tpu_custom_call.1} parent=1 // loop_header_branch
      %18 = sbr.rel (%p16) target = $region8
    $region5: #{tpu_custom_call.1} parent=1 // loop_body
      %s20 = ssub.s32 %s15, 1
      %s21 = ssub.s32 %s15, 2
      %s28 = sadd.s32 1, %s23
      %p29 = scmp.ge.s32.totalorder %s28, 1
      %s30 = scalar_select %p29, 0, %s28
      %s31 = sadd.s32 1, %s22
      %s32 = scalar_select %p29, %s31, %s22
      %p33 = scmp.ge.s32.totalorder %s32, 2
      %s34 = scalar_select %p33, 0, %s32
      %s35 = ssub.s32 %s23, %s30
      %p36 = scmp.eq.s32.totalorder %s35, 0
      %s38 = sadd.s32 %s37, 1
      %s39 = scalar_select %p36, %s37, %s38
      %p42 = pneg %p36
      %p43 = scmp.eq.s32.totalorder %s15, 1
      %p44 = por %p42, %p43
      %p45 = scmp.ne.s32.totalorder %s37, %s40
      %p46 = scmp.eq.s32.totalorder %s15, 0
      %p47 = por %p45, %p46
      %p48 = scmp.ne.s32.totalorder %s37, %s40
      %p49 = scmp.eq.s32.totalorder %s20, 1
      %p50 = por %p48, %p49
      %p51 = scmp.ne.s32.totalorder %s40, %s41
      %p52 = scmp.eq.s32.totalorder %s20, 0
      %p53 = por %p51, %p52
      %p54 = scmp.ne.s32.totalorder %s40, %s41
      %p55 = scmp.eq.s32.totalorder %s21, 1
      %p56 = por %p54, %p55
      %p58 = scmp.ne.s32.totalorder %s41, %s57
      %p59 = scmp.eq.s32.totalorder %s21, 0
      %p60 = por %p58, %p59
      %s61 = ssub.s32 %s22, %s34
      %s62 = ssub.s32 %s23, %s30
      %s63 = sor.u32 %s61, %s62
      %p64 = scmp.eq.s32.totalorder %s63, 0
      %s66 = sadd.s32 %s65, 1
      %s67 = scalar_select %p64, %s65, %s66
      %p70 = pneg %p64
      %p71 = scmp.eq.s32.totalorder %s15, 1
      %p72 = por %p70, %p71
      %p73 = scmp.ne.s32.totalorder %s65, %s68
      %p74 = scmp.eq.s32.totalorder %s15, 0
      %p75 = por %p73, %p74
      %p76 = scmp.ne.s32.totalorder %s65, %s68
      %p77 = scmp.eq.s32.totalorder %s20, 1
      %p78 = por %p76, %p77
      %p79 = scmp.ne.s32.totalorder %s68, %s69
      %p80 = scmp.eq.s32.totalorder %s20, 0
      %p81 = por %p79, %p80
      %p82 = scmp.ne.s32.totalorder %s68, %s69
      %p83 = scmp.eq.s32.totalorder %s21, 1
      %p84 = por %p82, %p83
      %p86 = scmp.ne.s32.totalorder %s69, %s85
      %p87 = scmp.eq.s32.totalorder %s21, 0
      %p88 = por %p86, %p87
      %s89 = ssub.s32 %s22, %s34
      %s90 = ssub.s32 %s23, %s30
      %s91 = sor.u32 %s89, %s90
      %p92 = scmp.eq.s32.totalorder %s91, 0
      %s94 = sadd.s32 %s93, 1
      %s95 = scalar_select %p92, %s93, %s94
      %p98 = pneg %p92
      %p99 = scmp.eq.s32.totalorder %s15, 1
      %p100 = por %p98, %p99
      %p101 = scmp.ne.s32.totalorder %s93, %s96
      %p102 = scmp.eq.s32.totalorder %s15, 0
      %p103 = por %p101, %p102
      %p104 = scmp.ne.s32.totalorder %s93, %s96
      %p105 = scmp.eq.s32.totalorder %s20, 1
      %p106 = por %p104, %p105
      %p107 = scmp.ne.s32.totalorder %s96, %s97
      %p108 = scmp.eq.s32.totalorder %s20, 0
      %p109 = por %p107, %p108
      %p110 = scmp.ne.s32.totalorder %s96, %s97
      %p111 = scmp.eq.s32.totalorder %s21, 1
      %p112 = por %p110, %p111
      %p114 = scmp.ne.s32.totalorder %s97, %s113
      %p115 = scmp.eq.s32.totalorder %s21, 0
      %p116 = por %p114, %p115
      %p117 = scmp.le.s32.totalorder 1, %s15
      %p118 = scmp.lt.s32.totalorder %s15, 3
      %p119 = pnand %p117, %p118
      %p120 = pneg %p119
      // Predicated region
      $region9: #{tpu_custom_call.1} parent=5 // pred_check
        _
      $region10: #{tpu_custom_call.1} parent=5 // pred_check_branch
        %122 = sbr.rel (%p119) target = $region12
      $region11: #{tpu_custom_call.1} parent=5 // pred_region
        %s123 = ssub.s32 %s15, 1
        // Predicated region
        $region13: #{tpu_custom_call.1} parent=11 // pred_check
          %p124 = pneg %p53
        $region14: #{tpu_custom_call.1} parent=11 // pred_check_branch
          %126 = sbr.rel (%p124) target = $region16
        $region15: #{tpu_custom_call.1} parent=11 // pred_region
          %128 = vsyncadd [#allocation3], 0
          %s129 = smul.addr %s25, 4
          %s130 = scalar_lea.hbm %s0, %s129
          %s132 = sshll.u32 %s130, 4
          %s133 = int_to_ptr.hbm [resolvable:$true] %s132
          %s134 = sshll.u32 [#allocation2], 4
          %s135 = int_to_ptr.vmem [resolvable:$true] %s134
          %137 = dma.hbm_to_vmem [thread:$0]  %s133, 64, %s135, [#allocation3]
        $region16: #{tpu_custom_call.1} parent=11 // pred_fallthru
          _
      $region12: #{tpu_custom_call.1} parent=5 // pred_fallthru
        _
      %p138 = scmp.lt.s32.totalorder %s15, 2
      // Predicated region
      $region17: #{tpu_custom_call.1} parent=5 // pred_check
        %p139 = pneg %p138
      $region18: #{tpu_custom_call.1} parent=5 // pred_check_branch
        %141 = sbr.rel (%p139) target = $region20
      $region19: #{tpu_custom_call.1} parent=5 // pred_region
        // Predicated region
        $region21: #{tpu_custom_call.1} parent=19 // pred_check
          %p142 = pneg %p75
        $region22: #{tpu_custom_call.1} parent=19 // pred_check_branch
          %144 = sbr.rel (%p142) target = $region24
        $region23: #{tpu_custom_call.1} parent=19 // pred_region
          %s145 = sand.u32 %s65, 1
          %s146 = scalar_lea.sflag [#allocation6], %s145
          %s147 = sand.u32 %s65, 1
          %s148 = smul.addr %s147, 8
          %s149 = scalar_lea.vmem [#allocation5], %s148
          %151 = vsyncadd %s146, 0
          %s152 = smul.addr %s23, 2
          %s153 = smul.addr %s22, 2
          %s154 = sadd.s32 %s152, %s153
          %s155 = smul.addr %s154, 4
          %s156 = scalar_lea.hbm %s1, %s155
          %s158 = sshll.u32 %s156, 4
          %s159 = int_to_ptr.hbm [resolvable:$true] %s158
          %s160 = sshll.u32 %s149, 4
          %s161 = int_to_ptr.vmem [resolvable:$true] %s160
          %163 = dma.hbm_to_vmem [thread:$0]  %s159, 128, %s161, %s146
        $region24: #{tpu_custom_call.1} parent=19 // pred_fallthru
          _
      $region20: #{tpu_custom_call.1} parent=5 // pred_fallthru
        _
      %p164 = scmp.le.s32.totalorder 1, %s15
      %p165 = scmp.lt.s32.totalorder %s15, 3
      %p166 = pnand %p164, %p165
      %p167 = pneg %p166
      // Predicated region
      $region25: #{tpu_custom_call.1} parent=5 // pred_check
        _
      $region26: #{tpu_custom_call.1} parent=5 // pred_check_branch
        %169 = sbr.rel (%p166) target = $region28
      $region27: #{tpu_custom_call.1} parent=5 // pred_region
        %s170 = ssub.s32 %s15, 1
        // Predicated region
        $region29: #{tpu_custom_call.1} parent=27 // pred_check
          %p171 = pneg %p53
        $region30: #{tpu_custom_call.1} parent=27 // pred_check_branch
          %173 = sbr.rel (%p171) target = $region32
        $region31: #{tpu_custom_call.1} parent=27 // pred_region
          %175 = dma.done [#allocation3], 64
        $region32: #{tpu_custom_call.1} parent=27 // pred_fallthru
          _
        %s176 = sand.u32 %s68, 1
        %s177 = scalar_lea.sflag [#allocation6], %s176
        %s178 = sand.u32 %s68, 1
        %s179 = smul.addr %s178, 8
        %s180 = scalar_lea.vmem [#allocation5], %s179
        // Predicated region
        $region33: #{tpu_custom_call.1} parent=27 // pred_check
          %p181 = pneg %p81
        $region34: #{tpu_custom_call.1} parent=27 // pred_check_branch
          %183 = sbr.rel (%p181) target = $region36
        $region35: #{tpu_custom_call.1} parent=27 // pred_region
          %185 = dma.done %s177, 128
        $region36: #{tpu_custom_call.1} parent=27 // pred_fallthru
          _
        %p186 = pneg %p53
        %p187 = pneg %p50
        %s188 = sand.u32 %s68, 1
        %s189 = scalar_lea.sflag [#allocation6], %s188
        %s190 = sand.u32 %s68, 1
        %s191 = smul.addr %s190, 8
        %s192 = scalar_lea.vmem [#allocation5], %s191
        %p193 = pneg %p81
        %p194 = pneg %p78
        %p195 = pneg %p109
        %p196 = pneg %p106
        %s197 = sand.u32 %s96, 1
        %s198 = scalar_lea.sflag [#allocation4], %s197
        %s199 = sand.u32 %s96, 1
        %s200 = smul.addr %s199, 8
        %s201 = scalar_lea.vmem [#allocation7], %s200
        %v202 = vld [vmem:[%s180] sm:$0xff]
        %v203 = vld [vmem:[#allocation2] sm:$0xf]
        %v204 = vlaneseq
        %v205 = vand.u32 %v204, 127
        %v206 = vadd.s32 %v205, 128
        %v207 = vand.u32 %v205, 15
        %v208 = vand.u32 %v206, 15
        %vm209 = vcmp.ge.s32.totalorder %v205, 16
        %vm210 = vcmp.ge.s32.totalorder %v206, 16
        %vm211 = vcmp.lt.s32.totalorder %v205, 240
        %vm212 = vcmp.lt.s32.totalorder %v206, 240
        %vm213 = vcmp.ge.s32.totalorder %v207, 1
        %vm214 = vcmp.ge.s32.totalorder %v208, 1
        %vm215 = vcmp.le.s32.totalorder %v207, 14
        %vm216 = vcmp.le.s32.totalorder %v208, 14
        %218 = vst [vmem:[#allocation1] ss:$2 sm:$0xff] %v202
        %v219 = vld.sshfl [vmem:[#allocation1] sm:$0xff pattern:$0x75316420]
        %v220 = vld.sshfl [vmem:[#allocation1 + $0x8] sm:$0xff pattern:$0x75316420]
        %223 = vrot.lane.b32.xlu0 %v219, 1
        %v224 = vpop.permute.xlu0 %223
        %225 = vrot.lane.b32.xlu0 %v220, 1
        %v226 = vpop.permute.xlu0 %225
        %vm227 = vcmp.lt.s32.totalorder %v205, 1
        %v228 = vsel %vm227, %v224, %v226
        %v229 = vsel %vm227, %v226, %v224
        %v230 = vsel %vm213, 1, 0
        %v231 = vsel %vm214, 1, 0
        %vm232 = vcmp.eq.s32.totalorder %v230, 1
        %vm233 = vcmp.eq.s32.totalorder %v231, 1
        %v234 = vsel %vm232, %v229, 0.0
        %v235 = vsel %vm233, %v228, 0.0
        %236 = vst [vmem:[#allocation1] ss:$2 sm:$0xff] %v202
        %v237 = vld.sshfl [vmem:[#allocation1] sm:$0xff pattern:$0x75316420]
        %v238 = vld.sshfl [vmem:[#allocation1 + $0x8] sm:$0xff pattern:$0x75316420]
        %241 = vrot.lane.b32.xlu0 %v237, 127
        %v242 = vpop.permute.xlu0 %241
        %243 = vrot.lane.b32.xlu0 %v238, 127
        %v244 = vpop.permute.xlu0 %243
        %vm245 = vcmp.lt.s32.totalorder %v205, 127
        %v246 = vsel %vm245, %v242, %v244
        %v247 = vsel %vm245, %v244, %v242
        %v248 = vsel %vm215, 1, 0
        %v249 = vsel %vm216, 1, 0
        %vm250 = vcmp.eq.s32.totalorder %v248, 1
        %vm251 = vcmp.eq.s32.totalorder %v249, 1
        %v252 = vsel %vm250, %v246, 0.0
        %v253 = vsel %vm251, %v247, 0.0
        %255 = vset.pattern.permute.xlu0 3
        %256 = vperm.xlu0 %255, %v203
        %v257 = vpop.permute.xlu0 %256
        %v259 = vmul.f32 %v257, %v234
        %v260 = vmul.f32 %v257, %v235
        %261 = vset.pattern.permute.xlu0 4
        %262 = vperm.xlu0 %261, %v203
        %v263 = vpop.permute.xlu0 %262
        %265 = vst [vmem:[#allocation1] ss:$2 sm:$0xff] %v202
        %v266 = vld.sshfl [vmem:[#allocation1] sm:$0xff pattern:$0x75316420]
        %v267 = vld.sshfl [vmem:[#allocation1 + $0x8] sm:$0xff pattern:$0x75316420]
        %v270 = vmul.f32 %v263, %v266
        %v271 = vmul.f32 %v263, %v267
        %v272 = vadd.f32 %v259, %v270
        %v273 = vadd.f32 %v260, %v271
        %274 = vset.pattern.permute.xlu0 5
        %275 = vperm.xlu0 %274, %v203
        %v276 = vpop.permute.xlu0 %275
        %v278 = vmul.f32 %v276, %v252
        %v279 = vmul.f32 %v276, %v253
        %v280 = vadd.f32 %v272, %v278
        %v281 = vadd.f32 %v273, %v279
        %282 = vset.pattern.permute.xlu0 0
        %283 = vperm.xlu0 %282, %v203
        %v284 = vpop.permute.xlu0 %283
        %v286 = vmul.f32 %v284, %v234
        %v287 = vmul.f32 %v284, %v235
        %288 = vset.pattern.permute.xlu0 1
        %289 = vperm.xlu0 %288, %v203
        %v290 = vpop.permute.xlu0 %289
        %292 = vst [vmem:[#allocation1] ss:$2 sm:$0xff] %v202
        %v293 = vld.sshfl [vmem:[#allocation1] sm:$0xff pattern:$0x75316420]
        %v294 = vld.sshfl [vmem:[#allocation1 + $0x8] sm:$0xff pattern:$0x75316420]
        %v297 = vmul.f32 %v290, %v293
        %v298 = vmul.f32 %v290, %v294
        %v299 = vadd.f32 %v286, %v297
        %v300 = vadd.f32 %v287, %v298
        %301 = vset.pattern.permute.xlu0 2
        %302 = vperm.xlu0 %301, %v203
        %v303 = vpop.permute.xlu0 %302
        %v305 = vmul.f32 %v303, %v252
        %v306 = vmul.f32 %v303, %v253
        %v307 = vadd.f32 %v299, %v305
        %v308 = vadd.f32 %v300, %v306
        %309 = vrot.lane.b32.xlu0 %v307, 16
        %v310 = vpop.permute.xlu0 %309
        %311 = vrot.lane.b32.xlu0 %v308, 16
        %v312 = vpop.permute.xlu0 %311
        %vm313 = vcmp.lt.s32.totalorder %v205, 16
        %v314 = vsel %vm313, %v310, %v312
        %v315 = vsel %vm313, %v312, %v310
        %v316 = vsel %vm209, 1, 0
        %v317 = vsel %vm210, 1, 0
        %vm318 = vcmp.eq.s32.totalorder %v316, 1
        %vm319 = vcmp.eq.s32.totalorder %v317, 1
        %v320 = vsel %vm318, %v315, 0.0
        %v321 = vsel %vm319, %v314, 0.0
        %v322 = vadd.f32 %v280, %v320
        %v323 = vadd.f32 %v281, %v321
        %324 = vset.pattern.permute.xlu0 6
        %325 = vperm.xlu0 %324, %v203
        %v326 = vpop.permute.xlu0 %325
        %v328 = vmul.f32 %v326, %v234
        %v329 = vmul.f32 %v326, %v235
        %330 = vset.pattern.permute.xlu0 7
        %331 = vperm.xlu0 %330, %v203
        %v332 = vpop.permute.xlu0 %331
        %334 = vst [vmem:[#allocation1] ss:$2 sm:$0xff] %v202
        %v335 = vld.sshfl [vmem:[#allocation1] sm:$0xff pattern:$0x75316420]
        %v336 = vld.sshfl [vmem:[#allocation1 + $0x8] sm:$0xff pattern:$0x75316420]
        %v339 = vmul.f32 %v332, %v335
        %v340 = vmul.f32 %v332, %v336
        %v341 = vadd.f32 %v328, %v339
        %v342 = vadd.f32 %v329, %v340
        %343 = vset.pattern.permute.xlu0 8
        %344 = vperm.xlu0 %343, %v203
        %v345 = vpop.permute.xlu0 %344
        %v347 = vmul.f32 %v345, %v252
        %v348 = vmul.f32 %v345, %v253
        %v349 = vadd.f32 %v341, %v347
        %v350 = vadd.f32 %v342, %v348
        %351 = vrot.lane.b32.xlu0 %v349, 112
        %v352 = vpop.permute.xlu0 %351
        %353 = vrot.lane.b32.xlu0 %v350, 112
        %v354 = vpop.permute.xlu0 %353
        %vm355 = vcmp.lt.s32.totalorder %v205, 112
        %v356 = vsel %vm355, %v352, %v354
        %v357 = vsel %vm355, %v354, %v352
        %v358 = vsel %vm211, 1, 0
        %v359 = vsel %vm212, 1, 0
        %vm360 = vcmp.eq.s32.totalorder %v358, 1
        %vm361 = vcmp.eq.s32.totalorder %v359, 1
        %v362 = vsel %vm360, %v356, 0.0
        %v363 = vsel %vm361, %v357, 0.0
        %v364 = vadd.f32 %v322, %v362
        %v365 = vadd.f32 %v323, %v363
        %vm366 = vcmask 1043456
        %v367 = vsel %vm366, %v364, 0.0
        %v368 = vsel %vm366, %v365, 0.0
        %v369 = vadd.f32 %v367, %v368
        %370 = vadd.xlane.f32.xlu0 %v369
        %v371 = vpop.xlane.xlu0 %370
        %v372 = vmul.f32 %v371, 0.00390625
        %v373 = vsub.f32 %v364, %v372
        %v374 = vsub.f32 %v365, %v372
        %v375 = vmul.f32 %v373, %v373
        %v376 = vmul.f32 %v374, %v374
        %v377 = vsel %vm366, %v375, 0.0
        %v378 = vsel %vm366, %v376, 0.0
        %v379 = vadd.f32 %v377, %v378
        %380 = vadd.xlane.f32.xlu0 %v379
        %v381 = vpop.xlane.xlu0 %380
        %v382 = vmul.f32 %v381, 0.00390625
        %v383 = vadd.f32 %v382, 1e-05
        %v384 = vrsqrt.pop %v383
        %v385 = vmul.f32 %v384, %v383
        %v386 = vmul.f32 %v385, %v384
        %v387 = vmul.f32 0.5, %v386
        %v388 = vsub.f32 1.5, %v387
        %v389 = vmul.f32 %v384, %v388
        %vm390 = vweird.f32 %v383
        %vm391 = vweird.f32 %v384
        %vm392 = vmor %vm390, %vm391
        %v393 = vsel %vm392, %v384, %v389
        %v394 = vmul.f32 %v373, %v393
        %v395 = vmul.f32 %v374, %v393
        %v398 = vrot.slane %v395, 4
        %v399 = vsel %vm366, %v394, %v398
        %v401 = vmax.f32 %v202, %v399
        %402 = vst [vmem:[%s201] sm:$0xff] %v401
        %s403 = sand.u32 %s96, 1
        %s404 = scalar_lea.sflag [#allocation4], %s403
        %s405 = sand.u32 %s96, 1
        %s406 = smul.addr %s405, 8
        %s407 = scalar_lea.vmem [#allocation7], %s406
        // Predicated region
        $region37: #{tpu_custom_call.1} parent=27 // pred_check
          %p408 = pneg %p106
        $region38: #{tpu_custom_call.1} parent=27 // pred_check_branch
          %410 = sbr.rel (%p408) target = $region40
        $region39: #{tpu_custom_call.1} parent=27 // pred_region
          %412 = vsyncadd %s404, 0
          %s413 = smul.addr %s25, 2
          %s414 = smul.addr %s24, 2
          %s415 = sadd.s32 %s413, %s414
          %s416 = smul.addr %s415, 4
          %s417 = scalar_lea.hbm %s2, %s416
          %s419 = sshll.u32 %s407, 4
          %s420 = int_to_ptr.vmem [resolvable:$true] %s419
          %s421 = sshll.u32 %s417, 4
          %s422 = int_to_ptr.hbm [resolvable:$true] %s421
          %424 = dma.vmem_to_hbm [thread:$0]  %s420, 128, %s422, %s404
        $region40: #{tpu_custom_call.1} parent=27 // pred_fallthru
          _
      $region28: #{tpu_custom_call.1} parent=5 // pred_fallthru
        _
      %p425 = scmp.le.s32.totalorder 2, %s15
      // Predicated region
      $region41: #{tpu_custom_call.1} parent=5 // pred_check
        %p426 = pneg %p425
      $region42: #{tpu_custom_call.1} parent=5 // pred_check_branch
        %428 = sbr.rel (%p426) target = $region44
      $region43: #{tpu_custom_call.1} parent=5 // pred_region
        %s429 = ssub.s32 %s15, 2
        // Predicated region
        $region45: #{tpu_custom_call.1} parent=43 // pred_check
          %p430 = pneg %p112
        $region46: #{tpu_custom_call.1} parent=43 // pred_check_branch
          %432 = sbr.rel (%p430) target = $region48
        $region47: #{tpu_custom_call.1} parent=43 // pred_region
          %s433 = sand.u32 %s97, 1
          %s434 = scalar_lea.sflag [#allocation4], %s433
          %s435 = sand.u32 %s97, 1
          %s436 = smul.addr %s435, 8
          %s437 = scalar_lea.vmem [#allocation7], %s436
          %439 = dma.done %s434, 128
        $region48: #{tpu_custom_call.1} parent=43 // pred_fallthru
          _
      $region44: #{tpu_custom_call.1} parent=5 // pred_fallthru
        _
    $region6: #{tpu_custom_call.1} parent=1 // loop_footer
      %s19 = sadd.s32 1, %s15
    $region7: #{tpu_custom_call.1} parent=1 // loop_footer_branch
      %14 = sbr.rel target = $region3
    $region8: #{tpu_custom_call.1} parent=1 // loop_exit
      _
    %440 = vsyncpa [#allocation3], 1
    %s441 = scalar_lea.sflag [#allocation3], 1
    %442 = vsyncpa %s441, 1
    %443 = vsyncpa [#allocation6], 1
    %s444 = scalar_lea.sflag [#allocation6], 1
    %445 = vsyncpa %s444, 1
    %446 = vsyncpa [#allocation4], 1
    %s447 = scalar_lea.sflag [#allocation4], 1
    %448 = vsyncpa %s447, 1

</llo_original>
